<compile_context>
chip_gen: v5e
topology: v5e:2x2
jax: 0.10.0
libtpu: 0.0.40
codegen_flags: <defaults>
</compile_context>

<pallas_src>
import jax
import jax.numpy as jnp
from jax.experimental import pallas as pl
from jax.experimental.pallas import tpu as pltpu


def _round_up(x, m):
    return ((x + m - 1) // m) * m


# ---------------------------------------------------------------------------
# Kernel 1: conv1/conv2/conv3 (+BN+ReLU) and global max-pool over points.
# ---------------------------------------------------------------------------
def _make_conv_pool_kernel(Bt, TN, N, C):
    R = Bt * TN

    def kernel(x_ref,
               w1_ref, s1_ref, b1_ref,
               w2_ref, s2_ref, b2_ref,
               w3_ref, s3_ref, b3_ref,
               g_ref):
        n_idx = pl.program_id(1)

        x = x_ref[...].reshape(R, C)                                   # (R, C)

        # conv1 (1x1, K=C): C VPU broadcast-MACs instead of a zero-padded
        # K=C MXU matmul (C=3 << MXU contraction depth).
        if C <= 8:
            h = x[:, 0:1] * w1_ref[0:1, :]
            for c in range(1, C):
                h = h + x[:, c:c + 1] * w1_ref[c:c + 1, :]
        else:
            h = jnp.dot(x, w1_ref[...], preferred_element_type=jnp.float32)
        h = jnp.maximum(h * s1_ref[...] + b1_ref[...], 0.0)            # (R, 64)

        # conv2 (butterfly 1x1, dense-equivalent) + BN2 + ReLU -> (R, 128)
        h = jnp.dot(h, w2_ref[...], preferred_element_type=jnp.float32)
        h = jnp.maximum(h * s2_ref[...] + b2_ref[...], 0.0)

        # conv3 (butterfly 1x1, dense-equivalent) + BN3 + ReLU -> (R, 1024)
        h = jnp.dot(h, w3_ref[...], preferred_element_type=jnp.float32)
        h = jnp.maximum(h * s3_ref[...] + b3_ref[...], 0.0)

        h = h.reshape(Bt, TN, -1)

        # Mask rows past the true N: Pallas pads partial point tiles with
        # garbage, and post-BN/ReLU those rows are NOT zero, so they must be
        # excluded before the max.  Statically elided when TN divides N.
        if N % TN != 0:
            rows = (jax.lax.broadcasted_iota(jnp.int32, (1, TN, 1), 1)
                    + n_idx * TN)
            h = jnp.where(rows < N, h, -jnp.inf)

        tile_max = jnp.max(h, axis=1, keepdims=True)                   # (Bt, 1, 1024)

        # Running max across the N-tile axis; the output block stays resident
        # in VMEM across the whole "arbitrary" reduction axis.
        @pl.when(n_idx == 0)
        def _():
            g_ref[...] = tile_max

        @pl.when(n_idx > 0)
        def _():
            g_ref[...] = jnp.maximum(g_ref[...], tile_max)

    return kernel


# ---------------------------------------------------------------------------
# Kernel 2: fc1/fc2 (+BN+ReLU) + fc3 + identity, tiled over batch rows.
# ---------------------------------------------------------------------------
def _head_kernel(g_ref, w4_ref, s4_ref, b4_ref,
                 w5_ref, s5_ref, b5_ref, w6_ref, bi6_ref, out_ref):
    f = jnp.dot(g_ref[...], w4_ref[...], preferred_element_type=jnp.float32)
    f = jnp.maximum(f * s4_ref[...] + b4_ref[...], 0.0)                # (TB, 512)
    f = jnp.dot(f, w5_ref[...], preferred_element_type=jnp.float32)
    f = jnp.maximum(f * s5_ref[...] + b5_ref[...], 0.0)                # (TB, 256)
    f = jnp.dot(f, w6_ref[...], preferred_element_type=jnp.float32)
    out_ref[...] = f + bi6_ref[...]                                    # (TB, 128) lane-dense


def stn3d_forward(x_bnc, params, *, rows_target=512, tn_max=512, tb_head=256):
    """x_bnc: (B, N, C) float32. Returns (B, C, C)."""
    B, N, C = x_bnc.shape
    (w1, s1, b1, w2, s2, b2, w3, s3, b3,
     w4, s4, b4, w5, s5, b5, w6, b6, iden) = params

    # ---- tile selection: bound the conv3 tile to ~rows_target*4 KiB --------
    TN = N if N <= tn_max else tn_max          # N<=tn_max: full axis; else /8
    Bt = max(1, min(B, max(1, rows_target // TN)))
    B_pad = _round_up(B, Bt)
    if B_pad != B:
        x_bnc = jnp.pad(x_bnc, ((0, B_pad - B), (0, 0), (0, 0)))
    grid = (B_pad // Bt, pl.cdiv(N, TN))

    def wspec(arr):  # constant (full-array) block for weights/scales/biases
        zeros = (0,) * arr.ndim
        return pl.BlockSpec(arr.shape, lambda b, n, _z=zeros: _z)

    pooled = pl.pallas_call(
        _make_conv_pool_kernel(Bt, TN, N, C),
        out_shape=jax.ShapeDtypeStruct((B_pad, 1, 1024), jnp.float32),
        grid_spec=pltpu.PrefetchScalarGridSpec(
            num_scalar_prefetch=0,
            grid=grid,
            in_specs=[pl.BlockSpec((Bt, TN, C), lambda b, n: (b, n, 0))] +
                     [wspec(a) for a in (w1, s1, b1, w2, s2, b2, w3, s3, b3)],
            out_specs=pl.BlockSpec((Bt, 1, 1024), lambda b, n: (b, 0, 0)),
        ),
        compiler_params=pltpu.CompilerParams(
            dimension_semantics=("parallel", "arbitrary"),
            vmem_limit_bytes=32 * 1024 * 1024,
        ),
    )(x_bnc, w1, s1, b1, w2, s2, b2, w3, s3, b3)

    # ---- FC head: tiled over batch rows (M = TB per matmul, not M = 1) -----
    g = pooled.reshape(B_pad, 1024)

    TB = B_pad if B_pad <= tb_head else tb_head    # tb_head is a multiple of 8
    B_head = _round_up(B_pad, TB)
    if B_head != B_pad:
        g = jnp.pad(g, ((0, B_head - B_pad), (0, 0)))

    CC = C * C
    OUT_PAD = max(128, _round_up(CC, 128))         # lane-dense output slab
    w6p = jnp.pad(w6, ((0, 0), (0, OUT_PAD - CC)))
    bi6 = jnp.pad(b6 + iden, ((0, 0), (0, OUT_PAD - CC)))

    def hspec(arr):
        zeros = (0,) * arr.ndim
        return pl.BlockSpec(arr.shape, lambda i, _z=zeros: _z)

    head = pl.pallas_call(
        _head_kernel,
        out_shape=jax.ShapeDtypeStruct((B_head, OUT_PAD), jnp.float32),
        grid_spec=pltpu.PrefetchScalarGridSpec(
            num_scalar_prefetch=0,
            grid=(B_head // TB,),
            in_specs=[pl.BlockSpec((TB, 1024), lambda i: (i, 0))] +
                     [hspec(a) for a in (w4, s4, b4, w5, s5, b5, w6p, bi6)],
            out_specs=pl.BlockSpec((TB, OUT_PAD), lambda i: (i, 0)),
        ),
        compiler_params=pltpu.CompilerParams(
            dimension_semantics=("parallel",),
            vmem_limit_bytes=32 * 1024 * 1024,
        ),
    )(g, w4, s4, b4, w5, s5, b5, w6p, bi6)

    return head[:B, :CC].reshape(B, C, C)


def init_params(key, C=3, eps=1e-5):
    """Deterministic synthetic parameters. BN (inference mode) is folded into
    a per-channel scale s and shift b:  y = (x @ W) * s + b."""
    keys = iter(jax.random.split(key, 64))
    dims = [(C, 64), (64, 128), (128, 1024), (1024, 512), (512, 256)]

    def dense(shape):
        return jax.random.normal(next(keys), shape, jnp.float32) / jnp.sqrt(shape[0])

    params = []
    for din, dout in dims:
        w = dense((din, dout))
        lin_bias = 0.1 * jax.random.normal(next(keys), (dout,), jnp.float32)
        gamma = 1.0 + 0.1 * jax.random.normal(next(keys), (dout,), jnp.float32)
        beta = 0.1 * jax.random.normal(next(keys), (dout,), jnp.float32)
        mean = 0.1 * jax.random.normal(next(keys), (dout,), jnp.float32)
        var = 1.0 + 0.1 * jax.random.uniform(next(keys), (dout,), jnp.float32)
        s = gamma / jnp.sqrt(var + eps)
        b = (lin_bias - mean) * s + beta
        params += [w, s[None, :], b[None, :]]

    w6 = dense((256, C * C))
    b6 = (0.1 * jax.random.normal(next(keys), (C * C,), jnp.float32))[None, :]
    iden = jnp.eye(C, dtype=jnp.float32).reshape(1, C * C)
    params += [w6, b6, iden]
    return tuple(params)


def reference_forward(x_bnc, params):
    (w1, s1, b1, w2, s2, b2, w3, s3, b3,
     w4, s4, b4, w5, s5, b5, w6, b6, iden) = params
    B, N, C = x_bnc.shape
    h = jnp.maximum(jnp.einsum('bnc,cd->bnd', x_bnc, w1) * s1 + b1, 0.0)
    h = jnp.maximum(jnp.einsum('bnc,cd->bnd', h, w2) * s2 + b2, 0.0)
    h = jnp.maximum(jnp.einsum('bnc,cd->bnd', h, w3) * s3 + b3, 0.0)
    g = jnp.max(h, axis=1)                         # (B, 1024)
    f = jnp.maximum(g @ w4 * s4 + b4, 0.0)
    f = jnp.maximum(f @ w5 * s5 + b5, 0.0)
    f = f @ w6 + b6 + iden
    return f.reshape(B, C, C)


if __name__ == "__main__":
    C, B, N = 3, 2, 16                             # STN3d => 3x3 output transform
    key = jax.random.PRNGKey(0)
    kx, kp = jax.random.split(key)

    # PyTorch-style NCW input, transposed once to the kernel's (B, N, C) layout.
    x_ncw = jax.random.normal(kx, (B, C, N), jnp.float32)
    x_bnc = jnp.transpose(x_ncw, (0, 2, 1))

    params = init_params(kp, C)

    out = stn3d_forward(x_bnc, params)
    out = jax.block_until_ready(out)

    ref = reference_forward(x_bnc, params)
    assert out.shape == (B, C, C)
    assert jnp.allclose(out, ref, atol=1e-4, rtol=1e-4), "mismatch vs JAX reference"

    print("KERNEL_OK")
</pallas_src>

<mosaic_0001>
module attributes {stable_mosaic.version = 11 : i64} {
  func.func @kernel(%arg0: i32, %arg1: i32, %arg2: memref<2x16x3xf32, #tpu.memory_space<vmem>>, %arg3: memref<3x64xf32, #tpu.memory_space<vmem>>, %arg4: memref<1x64xf32, #tpu.memory_space<vmem>>, %arg5: memref<1x64xf32, #tpu.memory_space<vmem>>, %arg6: memref<64x128xf32, #tpu.memory_space<vmem>>, %arg7: memref<1x128xf32, #tpu.memory_space<vmem>>, %arg8: memref<1x128xf32, #tpu.memory_space<vmem>>, %arg9: memref<128x1024xf32, #tpu.memory_space<vmem>>, %arg10: memref<1x1024xf32, #tpu.memory_space<vmem>>, %arg11: memref<1x1024xf32, #tpu.memory_space<vmem>>, %arg12: memref<2x1x1024xf32, #tpu.memory_space<vmem>>) attributes {dimension_semantics = [#tpu.dimension_semantics<parallel>, #tpu.dimension_semantics<arbitrary>], iteration_bounds = array<i64: 1, 1>, scalar_prefetch = 0 : i64, scratch_operands = 0 : i64, tpu.core_type = #tpu.core_type<tc>, window_params = [{transform_indices = @transform_0, window_bounds = array<i64: 2, 16, 3>}, {pipeline_mode = #tpu.pipeline_mode<synchronous>, transform_indices = @transform_1, window_bounds = array<i64: 3, 64>}, {pipeline_mode = #tpu.pipeline_mode<synchronous>, transform_indices = @transform_2, window_bounds = array<i64: 1, 64>}, {pipeline_mode = #tpu.pipeline_mode<synchronous>, transform_indices = @transform_3, window_bounds = array<i64: 1, 64>}, {pipeline_mode = #tpu.pipeline_mode<synchronous>, transform_indices = @transform_4, window_bounds = array<i64: 64, 128>}, {pipeline_mode = #tpu.pipeline_mode<synchronous>, transform_indices = @transform_5, window_bounds = array<i64: 1, 128>}, {pipeline_mode = #tpu.pipeline_mode<synchronous>, transform_indices = @transform_6, window_bounds = array<i64: 1, 128>}, {pipeline_mode = #tpu.pipeline_mode<synchronous>, transform_indices = @transform_7, window_bounds = array<i64: 128, 1024>}, {pipeline_mode = #tpu.pipeline_mode<synchronous>, transform_indices = @transform_8, window_bounds = array<i64: 1, 1024>}, {pipeline_mode = #tpu.pipeline_mode<synchronous>, transform_indices = @transform_9, window_bounds = array<i64: 1, 1024>}, {transform_indices = @transform_10, window_bounds = array<i64: 2, 1, 1024>}]} {
    %c0 = arith.constant 0 : index
    %c0_0 = arith.constant 0 : index
    %c0_1 = arith.constant 0 : index
    %0 = vector.load %arg2[%c0, %c0_0, %c0_1] : memref<2x16x3xf32, #tpu.memory_space<vmem>>, vector<2x16x3xf32>
    %1 = vector.shape_cast %0 : vector<2x16x3xf32> to vector<32x3xf32>
    %2 = vector.extract_strided_slice %1 {offsets = [0, 0], sizes = [32, 1], strides = [1, 1]} : vector<32x3xf32> to vector<32x1xf32>
    %c0_2 = arith.constant 0 : index
    %c0_3 = arith.constant 0 : index
    %3 = vector.load %arg3[%c0_2, %c0_3] : memref<3x64xf32, #tpu.memory_space<vmem>>, vector<1x64xf32>
    %4 = vector.broadcast %2 : vector<32x1xf32> to vector<32x64xf32>
    %5 = vector.broadcast %3 : vector<1x64xf32> to vector<32x64xf32>
    %6 = arith.mulf %4, %5 : vector<32x64xf32>
    %7 = vector.extract_strided_slice %1 {offsets = [0, 1], sizes = [32, 1], strides = [1, 1]} : vector<32x3xf32> to vector<32x1xf32>
    %c1 = arith.constant 1 : index
    %c0_4 = arith.constant 0 : index
    %8 = vector.load %arg3[%c1, %c0_4] : memref<3x64xf32, #tpu.memory_space<vmem>>, vector<1x64xf32>
    %9 = vector.broadcast %7 : vector<32x1xf32> to vector<32x64xf32>
    %10 = vector.broadcast %8 : vector<1x64xf32> to vector<32x64xf32>
    %11 = arith.mulf %9, %10 : vector<32x64xf32>
    %12 = arith.addf %6, %11 : vector<32x64xf32>
    %13 = vector.extract_strided_slice %1 {offsets = [0, 2], sizes = [32, 1], strides = [1, 1]} : vector<32x3xf32> to vector<32x1xf32>
    %c2 = arith.constant 2 : index
    %c0_5 = arith.constant 0 : index
    %14 = vector.load %arg3[%c2, %c0_5] : memref<3x64xf32, #tpu.memory_space<vmem>>, vector<1x64xf32>
    %15 = vector.broadcast %13 : vector<32x1xf32> to vector<32x64xf32>
    %16 = vector.broadcast %14 : vector<1x64xf32> to vector<32x64xf32>
    %17 = arith.mulf %15, %16 : vector<32x64xf32>
    %18 = arith.addf %12, %17 : vector<32x64xf32>
    %c0_6 = arith.constant 0 : index
    %c0_7 = arith.constant 0 : index
    %19 = vector.load %arg4[%c0_6, %c0_7] : memref<1x64xf32, #tpu.memory_space<vmem>>, vector<1x64xf32>
    %20 = vector.broadcast %19 : vector<1x64xf32> to vector<32x64xf32>
    %21 = arith.mulf %18, %20 : vector<32x64xf32>
    %c0_8 = arith.constant 0 : index
    %c0_9 = arith.constant 0 : index
    %22 = vector.load %arg5[%c0_8, %c0_9] : memref<1x64xf32, #tpu.memory_space<vmem>>, vector<1x64xf32>
    %23 = vector.broadcast %22 : vector<1x64xf32> to vector<32x64xf32>
    %24 = arith.addf %21, %23 : vector<32x64xf32>
    %cst = arith.constant 0.000000e+00 : f32
    %25 = vector.broadcast %cst : f32 to vector<32x64xf32>
    %26 = arith.maximumf %24, %25 : vector<32x64xf32>
    %c0_10 = arith.constant 0 : index
    %c0_11 = arith.constant 0 : index
    %27 = vector.load %arg6[%c0_10, %c0_11] : memref<64x128xf32, #tpu.memory_space<vmem>>, vector<64x128xf32>
    %cst_12 = arith.constant dense<0.000000e+00> : vector<32x128xf32>
    %28 = tpu.matmul %26, %27, %cst_12 {dimension_numbers = #tpu.dot_dimension_numbers<[1], [0], [0], [1], [0, 0, 1, 1], [], []>} : vector<32x64xf32>, vector<64x128xf32>, vector<32x128xf32> -> vector<32x128xf32>
    %c0_13 = arith.constant 0 : index
    %c0_14 = arith.constant 0 : index
    %29 = vector.load %arg7[%c0_13, %c0_14] : memref<1x128xf32, #tpu.memory_space<vmem>>, vector<1x128xf32>
    %30 = vector.broadcast %29 : vector<1x128xf32> to vector<32x128xf32>
    %31 = arith.mulf %28, %30 : vector<32x128xf32>
    %c0_15 = arith.constant 0 : index
    %c0_16 = arith.constant 0 : index
    %32 = vector.load %arg8[%c0_15, %c0_16] : memref<1x128xf32, #tpu.memory_space<vmem>>, vector<1x128xf32>
    %33 = vector.broadcast %32 : vector<1x128xf32> to vector<32x128xf32>
    %34 = arith.addf %31, %33 : vector<32x128xf32>
    %cst_17 = arith.constant 0.000000e+00 : f32
    %35 = vector.broadcast %cst_17 : f32 to vector<32x128xf32>
    %36 = arith.maximumf %34, %35 : vector<32x128xf32>
    %c0_18 = arith.constant 0 : index
    %c0_19 = arith.constant 0 : index
    %37 = vector.load %arg9[%c0_18, %c0_19] : memref<128x1024xf32, #tpu.memory_space<vmem>>, vector<128x1024xf32>
    %cst_20 = arith.constant dense<0.000000e+00> : vector<32x1024xf32>
    %38 = tpu.matmul %36, %37, %cst_20 {dimension_numbers = #tpu.dot_dimension_numbers<[1], [0], [0], [1], [0, 0, 1, 1], [], []>} : vector<32x128xf32>, vector<128x1024xf32>, vector<32x1024xf32> -> vector<32x1024xf32>
    %c0_21 = arith.constant 0 : index
    %c0_22 = arith.constant 0 : index
    %39 = vector.load %arg10[%c0_21, %c0_22] : memref<1x1024xf32, #tpu.memory_space<vmem>>, vector<1x1024xf32>
    %40 = vector.broadcast %39 : vector<1x1024xf32> to vector<32x1024xf32>
    %41 = arith.mulf %38, %40 : vector<32x1024xf32>
    %c0_23 = arith.constant 0 : index
    %c0_24 = arith.constant 0 : index
    %42 = vector.load %arg11[%c0_23, %c0_24] : memref<1x1024xf32, #tpu.memory_space<vmem>>, vector<1x1024xf32>
    %43 = vector.broadcast %42 : vector<1x1024xf32> to vector<32x1024xf32>
    %44 = arith.addf %41, %43 : vector<32x1024xf32>
    %cst_25 = arith.constant 0.000000e+00 : f32
    %45 = vector.broadcast %cst_25 : f32 to vector<32x1024xf32>
    %46 = arith.maximumf %44, %45 : vector<32x1024xf32>
    %47 = vector.shape_cast %46 : vector<32x1024xf32> to vector<2x16x1024xf32>
    %cst_26 = arith.constant dense<0xFF800000> : vector<2x1024xf32>
    %48 = vector.multi_reduction <maximumf>, %47, %cst_26 [1] : vector<2x16x1024xf32> to vector<2x1024xf32>
    %49 = vector.shape_cast %48 : vector<2x1024xf32> to vector<2x1x1024xf32>
    %c0_i32 = arith.constant 0 : i32
    %50 = arith.cmpi eq, %arg1, %c0_i32 : i32
    %51 = arith.extui %50 : i1 to i32
    %c0_i32_27 = arith.constant 0 : i32
    %52 = arith.cmpi ne, %51, %c0_i32_27 : i32
    scf.if %52 {
      %c0_30 = arith.constant 0 : index
      %c0_31 = arith.constant 0 : index
      %c0_32 = arith.constant 0 : index
      %56 = vector.load %arg12[%c0_30, %c0_31, %c0_32] : memref<2x1x1024xf32, #tpu.memory_space<vmem>>, vector<2x1x1024xf32>
      tpu.vector_store %arg12[%c0_30, %c0_31, %c0_32], %49 {strides = array<i32>} : memref<2x1x1024xf32, #tpu.memory_space<vmem>>, vector<2x1x1024xf32>,
    } else {
    }
    %c0_i32_28 = arith.constant 0 : i32
    %53 = arith.cmpi sgt, %arg1, %c0_i32_28 : i32
    %54 = arith.extui %53 : i1 to i32
    %c0_i32_29 = arith.constant 0 : i32
    %55 = arith.cmpi ne, %54, %c0_i32_29 : i32
    scf.if %55 {
      %c0_30 = arith.constant 0 : index
      %c0_31 = arith.constant 0 : index
      %c0_32 = arith.constant 0 : index
      %56 = vector.load %arg12[%c0_30, %c0_31, %c0_32] : memref<2x1x1024xf32, #tpu.memory_space<vmem>>, vector<2x1x1024xf32>
      %57 = arith.maximumf %56, %49 : vector<2x1x1024xf32>
      %c0_33 = arith.constant 0 : index
      %c0_34 = arith.constant 0 : index
      %c0_35 = arith.constant 0 : index
      %58 = vector.load %arg12[%c0_33, %c0_34, %c0_35] : memref<2x1x1024xf32, #tpu.memory_space<vmem>>, vector<2x1x1024xf32>
      tpu.vector_store %arg12[%c0_33, %c0_34, %c0_35], %57 {strides = array<i32>} : memref<2x1x1024xf32, #tpu.memory_space<vmem>>, vector<2x1x1024xf32>,
    } else {
    }
    return
  }
  func.func @transform_0(%arg0: i32, %arg1: i32) -> (i32, i32, i32) {
    %c0_i32 = arith.constant 0 : i32
    %c0_i32_0 = arith.constant 0 : i32
    return %arg0, %arg1, %c0_i32 : i32, i32, i32
  }
  func.func @transform_1(%arg0: i32, %arg1: i32) -> (i32, i32) {
    %c0_i32 = arith.constant 0 : i32
    %c0_i32_0 = arith.constant 0 : i32
    %c0_i32_1 = arith.constant 0 : i32
    return %c0_i32, %c0_i32_0 : i32, i32
  }
  func.func @transform_2(%arg0: i32, %arg1: i32) -> (i32, i32) {
    %c0_i32 = arith.constant 0 : i32
    %c0_i32_0 = arith.constant 0 : i32
    %c0_i32_1 = arith.constant 0 : i32
    return %c0_i32, %c0_i32_0 : i32, i32
  }
  func.func @transform_3(%arg0: i32, %arg1: i32) -> (i32, i32) {
    %c0_i32 = arith.constant 0 : i32
    %c0_i32_0 = arith.constant 0 : i32
    %c0_i32_1 = arith.constant 0 : i32
    return %c0_i32, %c0_i32_0 : i32, i32
  }
  func.func @transform_4(%arg0: i32, %arg1: i32) -> (i32, i32) {
    %c0_i32 = arith.constant 0 : i32
    %c0_i32_0 = arith.constant 0 : i32
    %c0_i32_1 = arith.constant 0 : i32
    return %c0_i32, %c0_i32_0 : i32, i32
  }
  func.func @transform_5(%arg0: i32, %arg1: i32) -> (i32, i32) {
    %c0_i32 = arith.constant 0 : i32
    %c0_i32_0 = arith.constant 0 : i32
    %c0_i32_1 = arith.constant 0 : i32
    return %c0_i32, %c0_i32_0 : i32, i32
  }
  func.func @transform_6(%arg0: i32, %arg1: i32) -> (i32, i32) {
    %c0_i32 = arith.constant 0 : i32
    %c0_i32_0 = arith.constant 0 : i32
    %c0_i32_1 = arith.constant 0 : i32
    return %c0_i32, %c0_i32_0 : i32, i32
  }
  func.func @transform_7(%arg0: i32, %arg1: i32) -> (i32, i32) {
    %c0_i32 = arith.constant 0 : i32
    %c0_i32_0 = arith.constant 0 : i32
    %c0_i32_1 = arith.constant 0 : i32
    return %c0_i32, %c0_i32_0 : i32, i32
  }
  func.func @transform_8(%arg0: i32, %arg1: i32) -> (i32, i32) {
    %c0_i32 = arith.constant 0 : i32
    %c0_i32_0 = arith.constant 0 : i32
    %c0_i32_1 = arith.constant 0 : i32
    return %c0_i32, %c0_i32_0 : i32, i32
  }
  func.func @transform_9(%arg0: i32, %arg1: i32) -> (i32, i32) {
    %c0_i32 = arith.constant 0 : i32
    %c0_i32_0 = arith.constant 0 : i32
    %c0_i32_1 = arith.constant 0 : i32
    return %c0_i32, %c0_i32_0 : i32, i32
  }
  func.func @transform_10(%arg0: i32, %arg1: i32) -> (i32, i32, i32) {
    %c0_i32 = arith.constant 0 : i32
    %c0_i32_0 = arith.constant 0 : i32
    %c0_i32_1 = arith.constant 0 : i32
    return %arg0, %c0_i32, %c0_i32_0 : i32, i32, i32
  }
}

</mosaic_0001>

<llo_original>
// kernel: tpu_custom_call.1
$region0: #{tpu_custom_call.1}
  #allocation0 [shape = 'u32[]', space=smem, size = 0x4, offset = 0x4, fixed_abs, tag = 'smem constant byte address 0x4 - core index']
  #allocation1 [shape = 'u32[72,128]{1,0:T(1,128)}', space=vmem, size = 0x9000, scoped, tag = 'internal scratch']
  %s0 = inlined_call_operand.vmem [shape: f32[2,16,3], index: 0, kind: input, shape index: {}]
  %s1 = inlined_call_operand.vmem [shape: f32[3,64], index: 1, kind: input, shape index: {}]
  %s2 = inlined_call_operand.vmem [shape: f32[1,64], index: 2, kind: input, shape index: {}]
  %s3 = inlined_call_operand.vmem [shape: f32[1,64], index: 3, kind: input, shape index: {}]
  %s4 = inlined_call_operand.hbm [shape: f32[64,128], index: 4, kind: input, shape index: {}]
  %s5 = inlined_call_operand.vmem [shape: f32[1,128], index: 5, kind: input, shape index: {}]
  %s6 = inlined_call_operand.vmem [shape: f32[1,128], index: 6, kind: input, shape index: {}]
  %s7 = inlined_call_operand.hbm [shape: f32[128,1024], index: 7, kind: input, shape index: {}]
  %s8 = inlined_call_operand.vmem [shape: f32[1,1024], index: 8, kind: input, shape index: {}]
  %s9 = inlined_call_operand.vmem [shape: f32[1,1024], index: 9, kind: input, shape index: {}]
  %s10 = inlined_call_operand.hbm [shape: f32[2,1,1024], index: 10, kind: output, shape index: {}]
  %s11 = sld [smem:[#allocation0]]
  $region66: #{tpu_custom_call.1} parent=0
    _
  %s13 = ssub.s32 1, %s11
  %s14 = scalar_select 0, %s13, %s11
  $region1: #{tpu_custom_call.1} parent=0
    #allocation2 [shape = 'u8[32768]{0}', space=vmem, size = 0x8000, scoped, tag = 'input window, operand 4, single buffered']
    #allocation3 [shape = 's32[1]{0}', space=sflag, size = 0x4, scoped, tag = 'scoped memory for tpu_custom_call.1']
    #allocation4 [shape = 's32[1]{0}', space=sflag, size = 0x4, scoped, tag = 'scoped memory for tpu_custom_call.1']
    #allocation5 [shape = 'u8[524288]{0}', space=vmem, size = 0x80000, scoped, tag = 'input window, operand 7, single buffered']
    #allocation6 [shape = 's32[1]{0}', space=sflag, size = 0x4, scoped, tag = 'scoped memory for tpu_custom_call.1']
    #allocation7 [shape = 'u8[8192]{0}', space=vmem, size = 0x2000, scoped, tag = 'output window, operand 0, single buffered']
    %15 = vsyncpa [#allocation3], 0
    %16 = vsyncpa [#allocation6], 0
    %17 = vsyncpa [#allocation4], 0
    // Predicated region
    $region2: #{tpu_custom_call.1} parent=1 // pred_check
      _
    $region3: #{tpu_custom_call.1} parent=1 // pred_check_branch
      %19 = sbr.rel (0) target = $region5
    $region4: #{tpu_custom_call.1} parent=1 // pred_region
      _
    $region5: #{tpu_custom_call.1} parent=1 // pred_fallthru
      _
    // Predicated region
    $region6: #{tpu_custom_call.1} parent=1 // pred_check
      _
    $region7: #{tpu_custom_call.1} parent=1 // pred_check_branch
      %21 = sbr.rel (0) target = $region9
    $region8: #{tpu_custom_call.1} parent=1 // pred_region
      _
    $region9: #{tpu_custom_call.1} parent=1 // pred_fallthru
      _
    // Predicated region
    $region10: #{tpu_custom_call.1} parent=1 // pred_check
      _
    $region11: #{tpu_custom_call.1} parent=1 // pred_check_branch
      %23 = sbr.rel (0) target = $region13
    $region12: #{tpu_custom_call.1} parent=1 // pred_region
      _
    $region13: #{tpu_custom_call.1} parent=1 // pred_fallthru
      _
    // Predicated region
    $region14: #{tpu_custom_call.1} parent=1 // pred_check
      _
    $region15: #{tpu_custom_call.1} parent=1 // pred_check_branch
      %25 = sbr.rel (0) target = $region17
    $region16: #{tpu_custom_call.1} parent=1 // pred_region
      _
    $region17: #{tpu_custom_call.1} parent=1 // pred_fallthru
      _
    // Predicated region
    $region18: #{tpu_custom_call.1} parent=1 // pred_check
      _
    $region19: #{tpu_custom_call.1} parent=1 // pred_check_branch
      %27 = sbr.rel (0) target = $region21
    $region20: #{tpu_custom_call.1} parent=1 // pred_region
      %29 = vsyncadd [#allocation3], 0
      %s30 = sshll.u32 %s4, 4
      %s31 = int_to_ptr.hbm [resolvable:$true] %s30
      %s32 = sshll.u32 [#allocation2], 4
      %s33 = int_to_ptr.vmem [resolvable:$true] %s32
      %38 = dma.hbm_to_vmem [thread:$0]  %s31, 1024, %s33, [#allocation3], 128, 128, 8
    $region21: #{tpu_custom_call.1} parent=1 // pred_fallthru
      _
    // Predicated region
    $region22: #{tpu_custom_call.1} parent=1 // pred_check
      _
    $region23: #{tpu_custom_call.1} parent=1 // pred_check_branch
      %40 = sbr.rel (0) target = $region25
    $region24: #{tpu_custom_call.1} parent=1 // pred_region
      _
    $region25: #{tpu_custom_call.1} parent=1 // pred_fallthru
      _
    // Predicated region
    $region26: #{tpu_custom_call.1} parent=1 // pred_check
      _
    $region27: #{tpu_custom_call.1} parent=1 // pred_check_branch
      %42 = sbr.rel (0) target = $region29
    $region28: #{tpu_custom_call.1} parent=1 // pred_region
      _
    $region29: #{tpu_custom_call.1} parent=1 // pred_fallthru
      _
    // Predicated region
    $region30: #{tpu_custom_call.1} parent=1 // pred_check
      _
    $region31: #{tpu_custom_call.1} parent=1 // pred_check_branch
      %44 = sbr.rel (0) target = $region33
    $region32: #{tpu_custom_call.1} parent=1 // pred_region
      %46 = vsyncadd [#allocation6], 0
      %s47 = sshll.u32 %s7, 4
      %s48 = int_to_ptr.hbm [resolvable:$true] %s47
      %s49 = sshll.u32 [#allocation5], 4
      %s50 = int_to_ptr.vmem [resolvable:$true] %s49
      %55 = dma.hbm_to_vmem [thread:$0]  %s48, 16384, %s50, [#allocation6], 1024, 1024, 64
    $region33: #{tpu_custom_call.1} parent=1 // pred_fallthru
      _
    // Predicated region
    $region34: #{tpu_custom_call.1} parent=1 // pred_check
      _
    $region35: #{tpu_custom_call.1} parent=1 // pred_check_branch
      %57 = sbr.rel (0) target = $region37
    $region36: #{tpu_custom_call.1} parent=1 // pred_region
      _
    $region37: #{tpu_custom_call.1} parent=1 // pred_fallthru
      _
    // Predicated region
    $region38: #{tpu_custom_call.1} parent=1 // pred_check
      _
    $region39: #{tpu_custom_call.1} parent=1 // pred_check_branch
      %59 = sbr.rel (0) target = $region41
    $region40: #{tpu_custom_call.1} parent=1 // pred_region
      _
    $region41: #{tpu_custom_call.1} parent=1 // pred_fallthru
      _
    // Predicated region
    $region42: #{tpu_custom_call.1} parent=1 // pred_check
      _
    $region43: #{tpu_custom_call.1} parent=1 // pred_check_branch
      %61 = sbr.rel (0) target = $region45
    $region44: #{tpu_custom_call.1} parent=1 // pred_region
      %63 = dma.done [#allocation3], 1024
    $region45: #{tpu_custom_call.1} parent=1 // pred_fallthru
      _
    // Predicated region
    $region46: #{tpu_custom_call.1} parent=1 // pred_check
      _
    $region47: #{tpu_custom_call.1} parent=1 // pred_check_branch
      %65 = sbr.rel (0) target = $region49
    $region48: #{tpu_custom_call.1} parent=1 // pred_region
      %67 = dma.done [#allocation6], 16384
    $region49: #{tpu_custom_call.1} parent=1 // pred_fallthru
      _
    %v68 = vld [vmem:[%s0] sm:$0xff]
    %v69 = vld [vmem:[%s0 + $0x8] sm:$0xff]
    %v70 = vld [vmem:[%s0 + $0x10] sm:$0xff]
    %v71 = vld [vmem:[%s0 + $0x18] sm:$0xff]
    %v72 = vld [vmem:[%s1] sm:$0x1]
    %74 = vset.pattern.permute.xlu0 0
    %75 = vperm.xlu0 %74, %v68
    %v76 = vpop.permute.xlu0 %75
    %79 = vset.pattern.permute.xlu0 0
    %80 = vperm.xlu0 %79, %v69
    %v81 = vpop.permute.xlu0 %80
    %84 = vset.pattern.permute.xlu0 0
    %85 = vperm.xlu0 %84, %v70
    %v86 = vpop.permute.xlu0 %85
    %89 = vset.pattern.permute.xlu0 0
    %90 = vperm.xlu0 %89, %v71
    %v91 = vpop.permute.xlu0 %90
    %v93 = vperm.slane %v72, 0
    %v94 = vmul.f32 %v76, %v93
    %v95 = vmul.f32 %v81, %v93
    %v96 = vmul.f32 %v86, %v93
    %v97 = vmul.f32 %v91, %v93
    %v98 = vld [vmem:[%s1 + $0x1] sm:$0x1]
    %99 = vset.pattern.permute.xlu0 1
    %100 = vperm.xlu0 %99, %v68
    %v101 = vpop.permute.xlu0 %100
    %103 = vset.pattern.permute.xlu0 1
    %104 = vperm.xlu0 %103, %v69
    %v105 = vpop.permute.xlu0 %104
    %107 = vset.pattern.permute.xlu0 1
    %108 = vperm.xlu0 %107, %v70
    %v109 = vpop.permute.xlu0 %108
    %111 = vset.pattern.permute.xlu0 1
    %112 = vperm.xlu0 %111, %v71
    %v113 = vpop.permute.xlu0 %112
    %v115 = vperm.slane %v98, 0
    %v116 = vmul.f32 %v101, %v115
    %v117 = vmul.f32 %v105, %v115
    %v118 = vmul.f32 %v109, %v115
    %v119 = vmul.f32 %v113, %v115
    %v120 = vadd.f32 %v94, %v116
    %v121 = vadd.f32 %v95, %v117
    %v122 = vadd.f32 %v96, %v118
    %v123 = vadd.f32 %v97, %v119
    %v124 = vld [vmem:[%s1 + $0x2] sm:$0x1]
    %125 = vset.pattern.permute.xlu0 2
    %126 = vperm.xlu0 %125, %v68
    %v127 = vpop.permute.xlu0 %126
    %129 = vset.pattern.permute.xlu0 2
    %130 = vperm.xlu0 %129, %v69
    %v131 = vpop.permute.xlu0 %130
    %133 = vset.pattern.permute.xlu0 2
    %134 = vperm.xlu0 %133, %v70
    %v135 = vpop.permute.xlu0 %134
    %137 = vset.pattern.permute.xlu0 2
    %138 = vperm.xlu0 %137, %v71
    %v139 = vpop.permute.xlu0 %138
    %v141 = vperm.slane %v124, 0
    %v142 = vmul.f32 %v127, %v141
    %v143 = vmul.f32 %v131, %v141
    %v144 = vmul.f32 %v135, %v141
    %v145 = vmul.f32 %v139, %v141
    %v146 = vadd.f32 %v120, %v142
    %v147 = vadd.f32 %v121, %v143
    %v148 = vadd.f32 %v122, %v144
    %v149 = vadd.f32 %v123, %v145
    %v150 = vld [vmem:[%s2] sm:$0x1]
    %v152 = vperm.slane %v150, 0
    %v154 = vmul.f32 %v146, %v152
    %v155 = vmul.f32 %v147, %v152
    %v156 = vmul.f32 %v148, %v152
    %v157 = vmul.f32 %v149, %v152
    %v158 = vld [vmem:[%s3] sm:$0x1]
    %v160 = vperm.slane %v158, 0
    %v162 = vadd.f32 %v154, %v160
    %v163 = vadd.f32 %v155, %v160
    %v164 = vadd.f32 %v156, %v160
    %v165 = vadd.f32 %v157, %v160
    %v166 = vmax.f32 %v162, 0.0
    %v167 = vmax.f32 %v163, 0.0
    %v168 = vmax.f32 %v164, 0.0
    %v169 = vmax.f32 %v165, 0.0
    %v170 = vld [vmem:[#allocation2] sm:$0xff]
    %v171 = vld [vmem:[#allocation2 + $0x8] sm:$0xff]
    %v172 = vld [vmem:[#allocation2 + $0x10] sm:$0xff]
    %v173 = vld [vmem:[#allocation2 + $0x18] sm:$0xff]
    %v174 = vld [vmem:[#allocation2 + $0x20] sm:$0xff]
    %v175 = vld [vmem:[#allocation2 + $0x28] sm:$0xff]
    %v176 = vld [vmem:[#allocation2 + $0x30] sm:$0xff]
    %v177 = vld [vmem:[#allocation2 + $0x38] sm:$0xff]
    %vm178 = vcmask 523264
    %v180 = vsel %vm178, %v166, 0
    %v183 = vsel %vm178, %v167, 0
    %v186 = vsel %vm178, %v168, 0
    %v189 = vsel %vm178, %v169, 0
    %191 = vmatpush.msra.mxu0 0.0
    %192 = vmatpush.msra.mxu0 0.0
    %193 = vmatpush.msra.mxu0 0.0
    %194 = vmatpush.msra.mxu0 0.0
    %195 = vmatpush.msra.mxu0 0.0
    %196 = vmatpush.msra.mxu0 0.0
    %197 = vmatpush.msra.mxu0 0.0
    %198 = vmatpush.msra.mxu0 0.0
    %199 = vmatpush.msra.mxu0 %v177
    %200 = vmatpush.msra.mxu0 %v176
    %201 = vmatpush.msra.mxu0 %v175
    %202 = vmatpush.msra.mxu0 %v174
    %203 = vmatpush.msra.mxu0 %v173
    %204 = vmatpush.msra.mxu0 %v172
    %205 = vmatpush.msra.mxu0 %v171
    %206 = vmatpush.msra.mxu0 %v170
    %207 = vmatmul.f32.gmra.mxu0 %v180
    %v208 = vpop.f32.mrf.mxu0
    %v209 = vadd.f32 0.0, %v208
    %210 = vmatmul.f32.gmra.mxu0 %v183
    %v211 = vpop.f32.mrf.mxu0
    %v212 = vadd.f32 0.0, %v211
    %213 = vmatmul.f32.gmra.mxu0 %v186
    %v214 = vpop.f32.mrf.mxu0
    %v215 = vadd.f32 0.0, %v214
    %216 = vmatmul.f32.gmra.mxu0 %v189
    %v217 = vpop.f32.mrf.mxu0
    %v218 = vadd.f32 0.0, %v217
    %219 = vdwg.mxu0
    %v220 = vld [vmem:[%s5] sm:$0x1]
    %v222 = vperm.slane %v220, 0
    %v224 = vmul.f32 %v209, %v222
    %v225 = vmul.f32 %v212, %v222
    %v226 = vmul.f32 %v215, %v222
    %v227 = vmul.f32 %v218, %v222
    %v228 = vld [vmem:[%s6] sm:$0x1]
    %v230 = vperm.slane %v228, 0
    %v232 = vadd.f32 %v224, %v230
    %v233 = vadd.f32 %v225, %v230
    %v234 = vadd.f32 %v226, %v230
    %v235 = vadd.f32 %v227, %v230
    %v236 = vmax.f32 %v232, 0.0
    %v237 = vmax.f32 %v233, 0.0
    %v238 = vmax.f32 %v234, 0.0
    %v239 = vmax.f32 %v235, 0.0
    %v240 = vld [vmem:[#allocation5] sm:$0xff]
    %v241 = vld [vmem:[#allocation5 + $0x8] sm:$0xff]
    %v242 = vld [vmem:[#allocation5 + $0x10] sm:$0xff]
    %v243 = vld [vmem:[#allocation5 + $0x18] sm:$0xff]
    %v244 = vld [vmem:[#allocation5 + $0x20] sm:$0xff]
    %v245 = vld [vmem:[#allocation5 + $0x28] sm:$0xff]
    %v246 = vld [vmem:[#allocation5 + $0x30] sm:$0xff]
    %v247 = vld [vmem:[#allocation5 + $0x38] sm:$0xff]
    %v248 = vld [vmem:[#allocation5 + $0x40] sm:$0xff]
    %v249 = vld [vmem:[#allocation5 + $0x48] sm:$0xff]
    %v250 = vld [vmem:[#allocation5 + $0x50] sm:$0xff]
    %v251 = vld [vmem:[#allocation5 + $0x58] sm:$0xff]
    %v252 = vld [vmem:[#allocation5 + $0x60] sm:$0xff]
    %v253 = vld [vmem:[#allocation5 + $0x68] sm:$0xff]
    %v254 = vld [vmem:[#allocation5 + $0x70] sm:$0xff]
    %v255 = vld [vmem:[#allocation5 + $0x78] sm:$0xff]
    %v256 = vld [vmem:[#allocation5 + $0x80] sm:$0xff]
    %v257 = vld [vmem:[#allocation5 + $0x88] sm:$0xff]
    %v258 = vld [vmem:[#allocation5 + $0x90] sm:$0xff]
    %v259 = vld [vmem:[#allocation5 + $0x98] sm:$0xff]
    %v260 = vld [vmem:[#allocation5 + $0xa0] sm:$0xff]
    %v261 = vld [vmem:[#allocation5 + $0xa8] sm:$0xff]
    %v262 = vld [vmem:[#allocation5 + $0xb0] sm:$0xff]
    %v263 = vld [vmem:[#allocation5 + $0xb8] sm:$0xff]
    %v264 = vld [vmem:[#allocation5 + $0xc0] sm:$0xff]
    %v265 = vld [vmem:[#allocation5 + $0xc8] sm:$0xff]
    %v266 = vld [vmem:[#allocation5 + $0xd0] sm:$0xff]
    %v267 = vld [vmem:[#allocation5 + $0xd8] sm:$0xff]
    %v268 = vld [vmem:[#allocation5 + $0xe0] sm:$0xff]
    %v269 = vld [vmem:[#allocation5 + $0xe8] sm:$0xff]
    %v270 = vld [vmem:[#allocation5 + $0xf0] sm:$0xff]
    %v271 = vld [vmem:[#allocation5 + $0xf8] sm:$0xff]
    %v272 = vld [vmem:[#allocation5 + $0x100] sm:$0xff]
    %v273 = vld [vmem:[#allocation5 + $0x108] sm:$0xff]
    %v274 = vld [vmem:[#allocation5 + $0x110] sm:$0xff]
    %v275 = vld [vmem:[#allocation5 + $0x118] sm:$0xff]
    %v276 = vld [vmem:[#allocation5 + $0x120] sm:$0xff]
    %v277 = vld [vmem:[#allocation5 + $0x128] sm:$0xff]
    %v278 = vld [vmem:[#allocation5 + $0x130] sm:$0xff]
    %v279 = vld [vmem:[#allocation5 + $0x138] sm:$0xff]
    %v280 = vld [vmem:[#allocation5 + $0x140] sm:$0xff]
    %v281 = vld [vmem:[#allocation5 + $0x148] sm:$0xff]
    %v282 = vld [vmem:[#allocation5 + $0x150] sm:$0xff]
    %v283 = vld [vmem:[#allocation5 + $0x158] sm:$0xff]
    %v284 = vld [vmem:[#allocation5 + $0x160] sm:$0xff]
    %v285 = vld [vmem:[#allocation5 + $0x168] sm:$0xff]
    %v286 = vld [vmem:[#allocation5 + $0x170] sm:$0xff]
    %v287 = vld [vmem:[#allocation5 + $0x178] sm:$0xff]
    %v288 = vld [vmem:[#allocation5 + $0x180] sm:$0xff]
    %v289 = vld [vmem:[#allocation5 + $0x188] sm:$0xff]
    %v290 = vld [vmem:[#allocation5 + $0x190] sm:$0xff]
    %v291 = vld [vmem:[#allocation5 + $0x198] sm:$0xff]
    %v292 = vld [vmem:[#allocation5 + $0x1a0] sm:$0xff]
    %v293 = vld [vmem:[#allocation5 + $0x1a8] sm:$0xff]
    %v294 = vld [vmem:[#allocation5 + $0x1b0] sm:$0xff]
    %v295 = vld [vmem:[#allocation5 + $0x1b8] sm:$0xff]
    %v296 = vld [vmem:[#allocation5 + $0x1c0] sm:$0xff]
    %v297 = vld [vmem:[#allocation5 + $0x1c8] sm:$0xff]
    %v298 = vld [vmem:[#allocation5 + $0x1d0] sm:$0xff]
    %v299 = vld [vmem:[#allocation5 + $0x1d8] sm:$0xff]
    %v300 = vld [vmem:[#allocation5 + $0x1e0] sm:$0xff]
    %v301 = vld [vmem:[#allocation5 + $0x1e8] sm:$0xff]
    %v302 = vld [vmem:[#allocation5 + $0x1f0] sm:$0xff]
    %v303 = vld [vmem:[#allocation5 + $0x1f8] sm:$0xff]
    %v304 = vld [vmem:[#allocation5 + $0x200] sm:$0xff]
    %v305 = vld [vmem:[#allocation5 + $0x208] sm:$0xff]
    %v306 = vld [vmem:[#allocation5 + $0x210] sm:$0xff]
    %v307 = vld [vmem:[#allocation5 + $0x218] sm:$0xff]
    %v308 = vld [vmem:[#allocation5 + $0x220] sm:$0xff]
    %v309 = vld [vmem:[#allocation5 + $0x228] sm:$0xff]
    %v310 = vld [vmem:[#allocation5 + $0x230] sm:$0xff]
    %v311 = vld [vmem:[#allocation5 + $0x238] sm:$0xff]
    %v312 = vld [vmem:[#allocation5 + $0x240] sm:$0xff]
    %v313 = vld [vmem:[#allocation5 + $0x248] sm:$0xff]
    %v314 = vld [vmem:[#allocation5 + $0x250] sm:$0xff]
    %v315 = vld [vmem:[#allocation5 + $0x258] sm:$0xff]
    %v316 = vld [vmem:[#allocation5 + $0x260] sm:$0xff]
    %v317 = vld [vmem:[#allocation5 + $0x268] sm:$0xff]
    %v318 = vld [vmem:[#allocation5 + $0x270] sm:$0xff]
    %v319 = vld [vmem:[#allocation5 + $0x278] sm:$0xff]
    %v320 = vld [vmem:[#allocation5 + $0x280] sm:$0xff]
    %v321 = vld [vmem:[#allocation5 + $0x288] sm:$0xff]
    %v322 = vld [vmem:[#allocation5 + $0x290] sm:$0xff]
    %v323 = vld [vmem:[#allocation5 + $0x298] sm:$0xff]
    %v324 = vld [vmem:[#allocation5 + $0x2a0] sm:$0xff]
    %v325 = vld [vmem:[#allocation5 + $0x2a8] sm:$0xff]
    %v326 = vld [vmem:[#allocation5 + $0x2b0] sm:$0xff]
    %v327 = vld [vmem:[#allocation5 + $0x2b8] sm:$0xff]
    %v328 = vld [vmem:[#allocation5 + $0x2c0] sm:$0xff]
    %v329 = vld [vmem:[#allocation5 + $0x2c8] sm:$0xff]
    %v330 = vld [vmem:[#allocation5 + $0x2d0] sm:$0xff]
    %v331 = vld [vmem:[#allocation5 + $0x2d8] sm:$0xff]
    %v332 = vld [vmem:[#allocation5 + $0x2e0] sm:$0xff]
    %v333 = vld [vmem:[#allocation5 + $0x2e8] sm:$0xff]
    %v334 = vld [vmem:[#allocation5 + $0x2f0] sm:$0xff]
    %v335 = vld [vmem:[#allocation5 + $0x2f8] sm:$0xff]
    %v336 = vld [vmem:[#allocation5 + $0x300] sm:$0xff]
    %v337 = vld [vmem:[#allocation5 + $0x308] sm:$0xff]
    %v338 = vld [vmem:[#allocation5 + $0x310] sm:$0xff]
    %v339 = vld [vmem:[#allocation5 + $0x318] sm:$0xff]
    %v340 = vld [vmem:[#allocation5 + $0x320] sm:$0xff]
    %v341 = vld [vmem:[#allocation5 + $0x328] sm:$0xff]
    %v342 = vld [vmem:[#allocation5 + $0x330] sm:$0xff]
    %v343 = vld [vmem:[#allocation5 + $0x338] sm:$0xff]
    %v344 = vld [vmem:[#allocation5 + $0x340] sm:$0xff]
    %v345 = vld [vmem:[#allocation5 + $0x348] sm:$0xff]
    %v346 = vld [vmem:[#allocation5 + $0x350] sm:$0xff]
    %v347 = vld [vmem:[#allocation5 + $0x358] sm:$0xff]
    %v348 = vld [vmem:[#allocation5 + $0x360] sm:$0xff]
    %v349 = vld [vmem:[#allocation5 + $0x368] sm:$0xff]
    %v350 = vld [vmem:[#allocation5 + $0x370] sm:$0xff]
    %v351 = vld [vmem:[#allocation5 + $0x378] sm:$0xff]
    %v352 = vld [vmem:[#allocation5 + $0x380] sm:$0xff]
    %v353 = vld [vmem:[#allocation5 + $0x388] sm:$0xff]
    %v354 = vld [vmem:[#allocation5 + $0x390] sm:$0xff]
    %v355 = vld [vmem:[#allocation5 + $0x398] sm:$0xff]
    %v356 = vld [vmem:[#allocation5 + $0x3a0] sm:$0xff]
    %v357 = vld [vmem:[#allocation5 + $0x3a8] sm:$0xff]
    %v358 = vld [vmem:[#allocation5 + $0x3b0] sm:$0xff]
    %v359 = vld [vmem:[#allocation5 + $0x3b8] sm:$0xff]
    %v360 = vld [vmem:[#allocation5 + $0x3c0] sm:$0xff]
    %v361 = vld [vmem:[#allocation5 + $0x3c8] sm:$0xff]
    %v362 = vld [vmem:[#allocation5 + $0x3d0] sm:$0xff]
    %v363 = vld [vmem:[#allocation5 + $0x3d8] sm:$0xff]
    %v364 = vld [vmem:[#allocation5 + $0x3e0] sm:$0xff]
    %v365 = vld [vmem:[#allocation5 + $0x3e8] sm:$0xff]
    %v366 = vld [vmem:[#allocation5 + $0x3f0] sm:$0xff]
    %v367 = vld [vmem:[#allocation5 + $0x3f8] sm:$0xff]
    %368 = vmatpush.msra.mxu0 %v360
    %369 = vmatpush.msra.mxu0 %v352
    %370 = vmatpush.msra.mxu0 %v344
    %371 = vmatpush.msra.mxu0 %v336
    %372 = vmatpush.msra.mxu0 %v328
    %373 = vmatpush.msra.mxu0 %v320
    %374 = vmatpush.msra.mxu0 %v312
    %375 = vmatpush.msra.mxu0 %v304
    %376 = vmatpush.msra.mxu0 %v296
    %377 = vmatpush.msra.mxu0 %v288
    %378 = vmatpush.msra.mxu0 %v280
    %379 = vmatpush.msra.mxu0 %v272
    %380 = vmatpush.msra.mxu0 %v264
    %381 = vmatpush.msra.mxu0 %v256
    %382 = vmatpush.msra.mxu0 %v248
    %383 = vmatpush.msra.mxu0 %v240
    %384 = vmatmul.f32.gmra.mxu0 %v236
    %v385 = vpop.f32.mrf.mxu0
    %v386 = vadd.f32 0.0, %v385
    %387 = vmatmul.f32.gmra.mxu0 %v237
    %v388 = vpop.f32.mrf.mxu0
    %v389 = vadd.f32 0.0, %v388
    %390 = vmatmul.f32.gmra.mxu0 %v238
    %v391 = vpop.f32.mrf.mxu0
    %v392 = vadd.f32 0.0, %v391
    %393 = vmatmul.f32.gmra.mxu0 %v239
    %v394 = vpop.f32.mrf.mxu0
    %v395 = vadd.f32 0.0, %v394
    %396 = vdwg.mxu0
    %397 = vmatpush.msra.mxu0 %v361
    %398 = vmatpush.msra.mxu0 %v353
    %399 = vmatpush.msra.mxu0 %v345
    %400 = vmatpush.msra.mxu0 %v337
    %401 = vmatpush.msra.mxu0 %v329
    %402 = vmatpush.msra.mxu0 %v321
    %403 = vmatpush.msra.mxu0 %v313
    %404 = vmatpush.msra.mxu0 %v305
    %405 = vmatpush.msra.mxu0 %v297
    %406 = vmatpush.msra.mxu0 %v289
    %407 = vmatpush.msra.mxu0 %v281
    %408 = vmatpush.msra.mxu0 %v273
    %409 = vmatpush.msra.mxu0 %v265
    %410 = vmatpush.msra.mxu0 %v257
    %411 = vmatpush.msra.mxu0 %v249
    %412 = vmatpush.msra.mxu0 %v241
    %413 = vmatmul.f32.gmra.mxu0 %v236
    %v414 = vpop.f32.mrf.mxu0
    %v415 = vadd.f32 0.0, %v414
    %416 = vmatmul.f32.gmra.mxu0 %v237
    %v417 = vpop.f32.mrf.mxu0
    %v418 = vadd.f32 0.0, %v417
    %419 = vmatmul.f32.gmra.mxu0 %v238
    %v420 = vpop.f32.mrf.mxu0
    %v421 = vadd.f32 0.0, %v420
    %422 = vmatmul.f32.gmra.mxu0 %v239
    %v423 = vpop.f32.mrf.mxu0
    %v424 = vadd.f32 0.0, %v423
    %425 = vdwg.mxu0
    %426 = vmatpush.msra.mxu0 %v362
    %427 = vmatpush.msra.mxu0 %v354
    %428 = vmatpush.msra.mxu0 %v346
    %429 = vmatpush.msra.mxu0 %v338
    %430 = vmatpush.msra.mxu0 %v330
    %431 = vmatpush.msra.mxu0 %v322
    %432 = vmatpush.msra.mxu0 %v314
    %433 = vmatpush.msra.mxu0 %v306
    %434 = vmatpush.msra.mxu0 %v298
    %435 = vmatpush.msra.mxu0 %v290
    %436 = vmatpush.msra.mxu0 %v282
    %437 = vmatpush.msra.mxu0 %v274
    %438 = vmatpush.msra.mxu0 %v266
    %439 = vmatpush.msra.mxu0 %v258
    %440 = vmatpush.msra.mxu0 %v250
    %441 = vmatpush.msra.mxu0 %v242
    %442 = vmatmul.f32.gmra.mxu0 %v236
    %v443 = vpop.f32.mrf.mxu0
    %v444 = vadd.f32 0.0, %v443
    %445 = vmatmul.f32.gmra.mxu0 %v237
    %v446 = vpop.f32.mrf.mxu0
    %v447 = vadd.f32 0.0, %v446
    %448 = vmatmul.f32.gmra.mxu0 %v238
    %v449 = vpop.f32.mrf.mxu0
    %v450 = vadd.f32 0.0, %v449
    %451 = vmatmul.f32.gmra.mxu0 %v239
    %v452 = vpop.f32.mrf.mxu0
    %v453 = vadd.f32 0.0, %v452
    %454 = vdwg.mxu0
    %455 = vmatpush.msra.mxu0 %v363
    %456 = vmatpush.msra.mxu0 %v355
    %457 = vmatpush.msra.mxu0 %v347
    %458 = vmatpush.msra.mxu0 %v339
    %459 = vmatpush.msra.mxu0 %v331
    %460 = vmatpush.msra.mxu0 %v323
    %461 = vmatpush.msra.mxu0 %v315
    %462 = vmatpush.msra.mxu0 %v307
    %463 = vmatpush.msra.mxu0 %v299
    %464 = vmatpush.msra.mxu0 %v291
    %465 = vmatpush.msra.mxu0 %v283
    %466 = vmatpush.msra.mxu0 %v275
    %467 = vmatpush.msra.mxu0 %v267
    %468 = vmatpush.msra.mxu0 %v259
    %469 = vmatpush.msra.mxu0 %v251
    %470 = vmatpush.msra.mxu0 %v243
    %471 = vmatmul.f32.gmra.mxu0 %v236
    %v472 = vpop.f32.mrf.mxu0
    %v473 = vadd.f32 0.0, %v472
    %474 = vmatmul.f32.gmra.mxu0 %v237
    %v475 = vpop.f32.mrf.mxu0
    %v476 = vadd.f32 0.0, %v475
    %477 = vmatmul.f32.gmra.mxu0 %v238
    %v478 = vpop.f32.mrf.mxu0
    %v479 = vadd.f32 0.0, %v478
    %480 = vmatmul.f32.gmra.mxu0 %v239
    %v481 = vpop.f32.mrf.mxu0
    %v482 = vadd.f32 0.0, %v481
    %483 = vdwg.mxu0
    %484 = vmatpush.msra.mxu0 %v364
    %485 = vmatpush.msra.mxu0 %v356
    %486 = vmatpush.msra.mxu0 %v348
    %487 = vmatpush.msra.mxu0 %v340
    %488 = vmatpush.msra.mxu0 %v332
    %489 = vmatpush.msra.mxu0 %v324
    %490 = vmatpush.msra.mxu0 %v316
    %491 = vmatpush.msra.mxu0 %v308
    %492 = vmatpush.msra.mxu0 %v300
    %493 = vmatpush.msra.mxu0 %v292
    %494 = vmatpush.msra.mxu0 %v284
    %495 = vmatpush.msra.mxu0 %v276
    %496 = vmatpush.msra.mxu0 %v268
    %497 = vmatpush.msra.mxu0 %v260
    %498 = vmatpush.msra.mxu0 %v252
    %499 = vmatpush.msra.mxu0 %v244
    %500 = vmatmul.f32.gmra.mxu0 %v236
    %v501 = vpop.f32.mrf.mxu0
    %v502 = vadd.f32 0.0, %v501
    %503 = vmatmul.f32.gmra.mxu0 %v237
    %v504 = vpop.f32.mrf.mxu0
    %v505 = vadd.f32 0.0, %v504
    %506 = vmatmul.f32.gmra.mxu0 %v238
    %v507 = vpop.f32.mrf.mxu0
    %v508 = vadd.f32 0.0, %v507
    %509 = vmatmul.f32.gmra.mxu0 %v239
    %v510 = vpop.f32.mrf.mxu0
    %v511 = vadd.f32 0.0, %v510
    %512 = vdwg.mxu0
    %513 = vmatpush.msra.mxu0 %v365
    %514 = vmatpush.msra.mxu0 %v357
    %515 = vmatpush.msra.mxu0 %v349
    %516 = vmatpush.msra.mxu0 %v341
    %517 = vmatpush.msra.mxu0 %v333
    %518 = vmatpush.msra.mxu0 %v325
    %519 = vmatpush.msra.mxu0 %v317
    %520 = vmatpush.msra.mxu0 %v309
    %521 = vmatpush.msra.mxu0 %v301
    %522 = vmatpush.msra.mxu0 %v293
    %523 = vmatpush.msra.mxu0 %v285
    %524 = vmatpush.msra.mxu0 %v277
    %525 = vmatpush.msra.mxu0 %v269
    %526 = vmatpush.msra.mxu0 %v261
    %527 = vmatpush.msra.mxu0 %v253
    %528 = vmatpush.msra.mxu0 %v245
    %529 = vmatmul.f32.gmra.mxu0 %v236
    %v530 = vpop.f32.mrf.mxu0
    %v531 = vadd.f32 0.0, %v530
    %532 = vmatmul.f32.gmra.mxu0 %v237
    %v533 = vpop.f32.mrf.mxu0
    %v534 = vadd.f32 0.0, %v533
    %535 = vmatmul.f32.gmra.mxu0 %v238
    %v536 = vpop.f32.mrf.mxu0
    %v537 = vadd.f32 0.0, %v536
    %538 = vmatmul.f32.gmra.mxu0 %v239
    %v539 = vpop.f32.mrf.mxu0
    %v540 = vadd.f32 0.0, %v539
    %541 = vdwg.mxu0
    %542 = vmatpush.msra.mxu0 %v366
    %543 = vmatpush.msra.mxu0 %v358
    %544 = vmatpush.msra.mxu0 %v350
    %545 = vmatpush.msra.mxu0 %v342
    %546 = vmatpush.msra.mxu0 %v334
    %547 = vmatpush.msra.mxu0 %v326
    %548 = vmatpush.msra.mxu0 %v318
    %549 = vmatpush.msra.mxu0 %v310
    %550 = vmatpush.msra.mxu0 %v302
    %551 = vmatpush.msra.mxu0 %v294
    %552 = vmatpush.msra.mxu0 %v286
    %553 = vmatpush.msra.mxu0 %v278
    %554 = vmatpush.msra.mxu0 %v270
    %555 = vmatpush.msra.mxu0 %v262
    %556 = vmatpush.msra.mxu0 %v254
    %557 = vmatpush.msra.mxu0 %v246
    %558 = vmatmul.f32.gmra.mxu0 %v236
    %v559 = vpop.f32.mrf.mxu0
    %v560 = vadd.f32 0.0, %v559
    %561 = vmatmul.f32.gmra.mxu0 %v237
    %v562 = vpop.f32.mrf.mxu0
    %v563 = vadd.f32 0.0, %v562
    %564 = vmatmul.f32.gmra.mxu0 %v238
    %v565 = vpop.f32.mrf.mxu0
    %v566 = vadd.f32 0.0, %v565
    %567 = vmatmul.f32.gmra.mxu0 %v239
    %v568 = vpop.f32.mrf.mxu0
    %v569 = vadd.f32 0.0, %v568
    %570 = vdwg.mxu0
    %571 = vmatpush.msra.mxu0 %v367
    %572 = vmatpush.msra.mxu0 %v359
    %573 = vmatpush.msra.mxu0 %v351
    %574 = vmatpush.msra.mxu0 %v343
    %575 = vmatpush.msra.mxu0 %v335
    %576 = vmatpush.msra.mxu0 %v327
    %577 = vmatpush.msra.mxu0 %v319
    %578 = vmatpush.msra.mxu0 %v311
    %579 = vmatpush.msra.mxu0 %v303
    %580 = vmatpush.msra.mxu0 %v295
    %581 = vmatpush.msra.mxu0 %v287
    %582 = vmatpush.msra.mxu0 %v279
    %583 = vmatpush.msra.mxu0 %v271
    %584 = vmatpush.msra.mxu0 %v263
    %585 = vmatpush.msra.mxu0 %v255
    %586 = vmatpush.msra.mxu0 %v247
    %587 = vmatmul.f32.gmra.mxu0 %v236
    %v588 = vpop.f32.mrf.mxu0
    %v589 = vadd.f32 0.0, %v588
    %590 = vmatmul.f32.gmra.mxu0 %v237
    %v591 = vpop.f32.mrf.mxu0
    %v592 = vadd.f32 0.0, %v591
    %593 = vmatmul.f32.gmra.mxu0 %v238
    %v594 = vpop.f32.mrf.mxu0
    %v595 = vadd.f32 0.0, %v594
    %596 = vmatmul.f32.gmra.mxu0 %v239
    %v597 = vpop.f32.mrf.mxu0
    %v598 = vadd.f32 0.0, %v597
    %599 = vdwg.mxu0
    %v600 = vld [vmem:[%s8] sm:$0xff]
    %v602 = vperm.slane %v600, 0
    %v603 = vperm.slane %v600, 1
    %v604 = vperm.slane %v600, 2
    %v605 = vperm.slane %v600, 3
    %v606 = vperm.slane %v600, 4
    %v607 = vperm.slane %v600, 5
    %v608 = vperm.slane %v600, 6
    %v609 = vperm.slane %v600, 7
    %v618 = vmul.f32 %v386, %v602
    %v619 = vmul.f32 %v415, %v603
    %v620 = vmul.f32 %v444, %v604
    %v621 = vmul.f32 %v473, %v605
    %v622 = vmul.f32 %v502, %v606
    %v623 = vmul.f32 %v531, %v607
    %v624 = vmul.f32 %v560, %v608
    %v625 = vmul.f32 %v589, %v609
    %v626 = vmul.f32 %v389, %v602
    %v627 = vmul.f32 %v418, %v603
    %v628 = vmul.f32 %v447, %v604
    %v629 = vmul.f32 %v476, %v605
    %v630 = vmul.f32 %v505, %v606
    %v631 = vmul.f32 %v534, %v607
    %v632 = vmul.f32 %v563, %v608
    %v633 = vmul.f32 %v592, %v609
    %v634 = vmul.f32 %v392, %v602
    %v635 = vmul.f32 %v421, %v603
    %v636 = vmul.f32 %v450, %v604
    %v637 = vmul.f32 %v479, %v605
    %v638 = vmul.f32 %v508, %v606
    %v639 = vmul.f32 %v537, %v607
    %v640 = vmul.f32 %v566, %v608
    %v641 = vmul.f32 %v595, %v609
    %v642 = vmul.f32 %v395, %v602
    %v643 = vmul.f32 %v424, %v603
    %v644 = vmul.f32 %v453, %v604
    %v645 = vmul.f32 %v482, %v605
    %v646 = vmul.f32 %v511, %v606
    %v647 = vmul.f32 %v540, %v607
    %v648 = vmul.f32 %v569, %v608
    %v649 = vmul.f32 %v598, %v609
    %v650 = vld [vmem:[%s9] sm:$0xff]
    %v652 = vperm.slane %v650, 0
    %v653 = vperm.slane %v650, 1
    %v654 = vperm.slane %v650, 2
    %v655 = vperm.slane %v650, 3
    %v656 = vperm.slane %v650, 4
    %v657 = vperm.slane %v650, 5
    %v658 = vperm.slane %v650, 6
    %v659 = vperm.slane %v650, 7
    %v668 = vadd.f32 %v618, %v652
    %v669 = vadd.f32 %v619, %v653
    %v670 = vadd.f32 %v620, %v654
    %v671 = vadd.f32 %v621, %v655
    %v672 = vadd.f32 %v622, %v656
    %v673 = vadd.f32 %v623, %v657
    %v674 = vadd.f32 %v624, %v658
    %v675 = vadd.f32 %v625, %v659
    %v676 = vadd.f32 %v626, %v652
    %v677 = vadd.f32 %v627, %v653
    %v678 = vadd.f32 %v628, %v654
    %v679 = vadd.f32 %v629, %v655
    %v680 = vadd.f32 %v630, %v656
    %v681 = vadd.f32 %v631, %v657
    %v682 = vadd.f32 %v632, %v658
    %v683 = vadd.f32 %v633, %v659
    %v684 = vadd.f32 %v634, %v652
    %v685 = vadd.f32 %v635, %v653
    %v686 = vadd.f32 %v636, %v654
    %v687 = vadd.f32 %v637, %v655
    %v688 = vadd.f32 %v638, %v656
    %v689 = vadd.f32 %v639, %v657
    %v690 = vadd.f32 %v640, %v658
    %v691 = vadd.f32 %v641, %v659
    %v692 = vadd.f32 %v642, %v652
    %v693 = vadd.f32 %v643, %v653
    %v694 = vadd.f32 %v644, %v654
    %v695 = vadd.f32 %v645, %v655
    %v696 = vadd.f32 %v646, %v656
    %v697 = vadd.f32 %v647, %v657
    %v698 = vadd.f32 %v648, %v658
    %v699 = vadd.f32 %v649, %v659
    %v700 = vmax.f32 %v668, 0.0
    %v701 = vmax.f32 %v669, 0.0
    %v702 = vmax.f32 %v670, 0.0
    %v703 = vmax.f32 %v671, 0.0
    %v704 = vmax.f32 %v672, 0.0
    %v705 = vmax.f32 %v673, 0.0
    %v706 = vmax.f32 %v674, 0.0
    %v707 = vmax.f32 %v675, 0.0
    %v708 = vmax.f32 %v676, 0.0
    %v709 = vmax.f32 %v677, 0.0
    %v710 = vmax.f32 %v678, 0.0
    %v711 = vmax.f32 %v679, 0.0
    %v712 = vmax.f32 %v680, 0.0
    %v713 = vmax.f32 %v681, 0.0
    %v714 = vmax.f32 %v682, 0.0
    %v715 = vmax.f32 %v683, 0.0
    %v716 = vmax.f32 %v684, 0.0
    %v717 = vmax.f32 %v685, 0.0
    %v718 = vmax.f32 %v686, 0.0
    %v719 = vmax.f32 %v687, 0.0
    %v720 = vmax.f32 %v688, 0.0
    %v721 = vmax.f32 %v689, 0.0
    %v722 = vmax.f32 %v690, 0.0
    %v723 = vmax.f32 %v691, 0.0
    %v724 = vmax.f32 %v692, 0.0
    %v725 = vmax.f32 %v693, 0.0
    %v726 = vmax.f32 %v694, 0.0
    %v727 = vmax.f32 %v695, 0.0
    %v728 = vmax.f32 %v696, 0.0
    %v729 = vmax.f32 %v697, 0.0
    %v730 = vmax.f32 %v698, 0.0
    %v731 = vmax.f32 %v699, 0.0
    %v732 = vmax.f32 %v700, %v708
    %v733 = vrot.slane %v732, 4
    %v734 = vmax.f32 %v732, %v733
    %v735 = vrot.slane %v734, 2
    %v736 = vmax.f32 %v734, %v735
    %v737 = vrot.slane %v736, 1
    %v738 = vmax.f32 %v736, %v737
    %v739 = vmax.f32 %v701, %v709
    %v740 = vrot.slane %v739, 4
    %v741 = vmax.f32 %v739, %v740
    %v742 = vrot.slane %v741, 2
    %v743 = vmax.f32 %v741, %v742
    %v744 = vrot.slane %v743, 1
    %v745 = vmax.f32 %v743, %v744
    %v746 = vmax.f32 %v702, %v710
    %v747 = vrot.slane %v746, 4
    %v748 = vmax.f32 %v746, %v747
    %v749 = vrot.slane %v748, 2
    %v750 = vmax.f32 %v748, %v749
    %v751 = vrot.slane %v750, 1
    %v752 = vmax.f32 %v750, %v751
    %v753 = vmax.f32 %v703, %v711
    %v754 = vrot.slane %v753, 4
    %v755 = vmax.f32 %v753, %v754
    %v756 = vrot.slane %v755, 2
    %v757 = vmax.f32 %v755, %v756
    %v758 = vrot.slane %v757, 1
    %v759 = vmax.f32 %v757, %v758
    %v760 = vmax.f32 %v704, %v712
    %v761 = vrot.slane %v760, 4
    %v762 = vmax.f32 %v760, %v761
    %v763 = vrot.slane %v762, 2
    %v764 = vmax.f32 %v762, %v763
    %v765 = vrot.slane %v764, 1
    %v766 = vmax.f32 %v764, %v765
    %v767 = vmax.f32 %v705, %v713
    %v768 = vrot.slane %v767, 4
    %v769 = vmax.f32 %v767, %v768
    %v770 = vrot.slane %v769, 2
    %v771 = vmax.f32 %v769, %v770
    %v772 = vrot.slane %v771, 1
    %v773 = vmax.f32 %v771, %v772
    %v774 = vmax.f32 %v706, %v714
    %v775 = vrot.slane %v774, 4
    %v776 = vmax.f32 %v774, %v775
    %v777 = vrot.slane %v776, 2
    %v778 = vmax.f32 %v776, %v777
    %v779 = vrot.slane %v778, 1
    %v780 = vmax.f32 %v778, %v779
    %v781 = vmax.f32 %v707, %v715
    %v782 = vrot.slane %v781, 4
    %v783 = vmax.f32 %v781, %v782
    %v784 = vrot.slane %v783, 2
    %v785 = vmax.f32 %v783, %v784
    %v786 = vrot.slane %v785, 1
    %v787 = vmax.f32 %v785, %v786
    %v788 = vmax.f32 %v716, %v724
    %v789 = vrot.slane %v788, 4
    %v790 = vmax.f32 %v788, %v789
    %v791 = vrot.slane %v790, 2
    %v792 = vmax.f32 %v790, %v791
    %v793 = vrot.slane %v792, 1
    %v794 = vmax.f32 %v792, %v793
    %v795 = vmax.f32 %v717, %v725
    %v796 = vrot.slane %v795, 4
    %v797 = vmax.f32 %v795, %v796
    %v798 = vrot.slane %v797, 2
    %v799 = vmax.f32 %v797, %v798
    %v800 = vrot.slane %v799, 1
    %v801 = vmax.f32 %v799, %v800
    %v802 = vmax.f32 %v718, %v726
    %v803 = vrot.slane %v802, 4
    %v804 = vmax.f32 %v802, %v803
    %v805 = vrot.slane %v804, 2
    %v806 = vmax.f32 %v804, %v805
    %v807 = vrot.slane %v806, 1
    %v808 = vmax.f32 %v806, %v807
    %v809 = vmax.f32 %v719, %v727
    %v810 = vrot.slane %v809, 4
    %v811 = vmax.f32 %v809, %v810
    %v812 = vrot.slane %v811, 2
    %v813 = vmax.f32 %v811, %v812
    %v814 = vrot.slane %v813, 1
    %v815 = vmax.f32 %v813, %v814
    %v816 = vmax.f32 %v720, %v728
    %v817 = vrot.slane %v816, 4
    %v818 = vmax.f32 %v816, %v817
    %v819 = vrot.slane %v818, 2
    %v820 = vmax.f32 %v818, %v819
    %v821 = vrot.slane %v820, 1
    %v822 = vmax.f32 %v820, %v821
    %v823 = vmax.f32 %v721, %v729
    %v824 = vrot.slane %v823, 4
    %v825 = vmax.f32 %v823, %v824
    %v826 = vrot.slane %v825, 2
    %v827 = vmax.f32 %v825, %v826
    %v828 = vrot.slane %v827, 1
    %v829 = vmax.f32 %v827, %v828
    %v830 = vmax.f32 %v722, %v730
    %v831 = vrot.slane %v830, 4
    %v832 = vmax.f32 %v830, %v831
    %v833 = vrot.slane %v832, 2
    %v834 = vmax.f32 %v832, %v833
    %v835 = vrot.slane %v834, 1
    %v836 = vmax.f32 %v834, %v835
    %v837 = vmax.f32 %v723, %v731
    %v838 = vrot.slane %v837, 4
    %v839 = vmax.f32 %v837, %v838
    %v840 = vrot.slane %v839, 2
    %v841 = vmax.f32 %v839, %v840
    %v842 = vrot.slane %v841, 1
    %v843 = vmax.f32 %v841, %v842
    %p844 = scmp.eq.s32.totalorder 0, 0
    // Predicated region
    $region50: #{tpu_custom_call.1} parent=1 // pred_check
      %p845 = pneg %p844
    $region51: #{tpu_custom_call.1} parent=1 // pred_check_branch
      %847 = sbr.rel (%p845) target = $region53
    $region52: #{tpu_custom_call.1} parent=1 // pred_region
      %v864 = vrot.slane %v745, 7
      %v865 = vrot.slane %v752, 6
      %v866 = vrot.slane %v759, 5
      %v867 = vrot.slane %v766, 4
      %v868 = vrot.slane %v773, 3
      %v869 = vrot.slane %v780, 2
      %v870 = vrot.slane %v787, 1
      %v871 = vrot.slane %v801, 7
      %v872 = vrot.slane %v808, 6
      %v873 = vrot.slane %v815, 5
      %v874 = vrot.slane %v822, 4
      %v875 = vrot.slane %v829, 3
      %v876 = vrot.slane %v836, 2
      %v877 = vrot.slane %v843, 1
      %vm878 = vcmask 1040384
      %v879 = vsel %vm878, %v738, %v864
      %vm880 = vcmask 1042434
      %v881 = vsel %vm880, %v865, %v866
      %vm882 = vcmask 1041408
      %v883 = vsel %vm882, %v879, %v881
      %vm884 = vcmask 1044484
      %v885 = vsel %vm884, %v867, %v868
      %vm886 = vcmask 1046534
      %v887 = vsel %vm886, %v869, %v870
      %vm888 = vcmask 1045508
      %v889 = vsel %vm888, %v885, %v887
      %vm890 = vcmask 1043456
      %v891 = vsel %vm890, %v883, %v889
      %v892 = vsel %vm878, %v794, %v871
      %v893 = vsel %vm880, %v872, %v873
      %v894 = vsel %vm882, %v892, %v893
      %v895 = vsel %vm884, %v874, %v875
      %v896 = vsel %vm886, %v876, %v877
      %v897 = vsel %vm888, %v895, %v896
      %v898 = vsel %vm890, %v894, %v897
      %901 = vst [vmem:[#allocation7] sm:$0xff] %v891
      %902 = vst [vmem:[#allocation7 + $0x8] sm:$0xff] %v898
    $region53: #{tpu_custom_call.1} parent=1 // pred_fallthru
      _
    %p903 = scmp.gt.s32.totalorder 0, 0
    // Predicated region
    $region54: #{tpu_custom_call.1} parent=1 // pred_check
      %p904 = pneg %p903
    $region55: #{tpu_custom_call.1} parent=1 // pred_check_branch
      %906 = sbr.rel (%p904) target = $region57
    $region56: #{tpu_custom_call.1} parent=1 // pred_region
      %v907 = vld [vmem:[#allocation7] sm:$0xff]
      %v908 = vld [vmem:[#allocation7 + $0x8] sm:$0xff]
      %v925 = vrot.slane %v745, 7
      %v926 = vrot.slane %v752, 6
      %v927 = vrot.slane %v759, 5
      %v928 = vrot.slane %v766, 4
      %v929 = vrot.slane %v773, 3
      %v930 = vrot.slane %v780, 2
      %v931 = vrot.slane %v787, 1
      %v932 = vrot.slane %v801, 7
      %v933 = vrot.slane %v808, 6
      %v934 = vrot.slane %v815, 5
      %v935 = vrot.slane %v822, 4
      %v936 = vrot.slane %v829, 3
      %v937 = vrot.slane %v836, 2
      %v938 = vrot.slane %v843, 1
      %vm939 = vcmask 1040384
      %v940 = vsel %vm939, %v738, %v925
      %vm941 = vcmask 1042434
      %v942 = vsel %vm941, %v926, %v927
      %vm943 = vcmask 1041408
      %v944 = vsel %vm943, %v940, %v942
      %vm945 = vcmask 1044484
      %v946 = vsel %vm945, %v928, %v929
      %vm947 = vcmask 1046534
      %v948 = vsel %vm947, %v930, %v931
      %vm949 = vcmask 1045508
      %v950 = vsel %vm949, %v946, %v948
      %vm951 = vcmask 1043456
      %v952 = vsel %vm951, %v944, %v950
      %v953 = vsel %vm939, %v794, %v932
      %v954 = vsel %vm941, %v933, %v934
      %v955 = vsel %vm943, %v953, %v954
      %v956 = vsel %vm945, %v935, %v936
      %v957 = vsel %vm947, %v937, %v938
      %v958 = vsel %vm949, %v956, %v957
      %v959 = vsel %vm951, %v955, %v958
      %v962 = vmax.f32 %v907, %v952
      %v963 = vmax.f32 %v908, %v959
      %964 = vst [vmem:[#allocation7] sm:$0xff] %v962
      %965 = vst [vmem:[#allocation7 + $0x8] sm:$0xff] %v963
    $region57: #{tpu_custom_call.1} parent=1 // pred_fallthru
      _
    // Predicated region
    $region58: #{tpu_custom_call.1} parent=1 // pred_check
      _
    $region59: #{tpu_custom_call.1} parent=1 // pred_check_branch
      %967 = sbr.rel (0) target = $region61
    $region60: #{tpu_custom_call.1} parent=1 // pred_region
      %969 = vsyncadd [#allocation4], 0
      %s970 = sshll.u32 [#allocation7], 4
      %s971 = int_to_ptr.vmem [resolvable:$true] %s970
      %s972 = sshll.u32 %s10, 4
      %s973 = int_to_ptr.hbm [resolvable:$true] %s972
      %978 = dma.vmem_to_hbm [thread:$0]  %s971, 256, %s973, [#allocation4], 128, 128, 8
    $region61: #{tpu_custom_call.1} parent=1 // pred_fallthru
      _
    // Predicated region
    $region62: #{tpu_custom_call.1} parent=1 // pred_check
      _
    $region63: #{tpu_custom_call.1} parent=1 // pred_check_branch
      %980 = sbr.rel (0) target = $region65
    $region64: #{tpu_custom_call.1} parent=1 // pred_region
      %982 = dma.done [#allocation4], 256
    $region65: #{tpu_custom_call.1} parent=1 // pred_fallthru
      _
    %983 = vsyncpa [#allocation3], 1
    %984 = vsyncpa [#allocation6], 1
    %985 = vsyncpa [#allocation4], 1

</llo_original>
